<compile_context>
chip_gen: v7x
topology: tpu7x:2x2x1
jax: 0.10.0
libtpu: 0.0.40
codegen_flags: <defaults>
</compile_context>

<pallas_src>
import functools

import jax
import jax.numpy as jnp
from jax.experimental import pallas as pl
from jax.experimental.pallas import tpu as pltpu


def _round_up(x: int, m: int) -> int:
    return (x + m - 1) // m * m


# ----------------------------------------------------------------------------
# Pallas kernel: full fused forward, everything VMEM-resident (no grid).
# ----------------------------------------------------------------------------
def actor_kernel(x_ref, w_ref, b_ref, out_ref, *,
                 obs_dim: int, obs_pad: int, lane: int, n_actions: int):
    x = x_ref[...]                                        # (B, obs_dim)

    # Static, sublane-aligned slices of the packed weight / bias blobs (free).
    w1 = w_ref[0:obs_dim, :]                              # (obs_dim, lane)
    w2 = w_ref[obs_pad:obs_pad + lane, :]                 # (lane, lane)
    wh = w_ref[obs_pad + lane:obs_pad + 2 * lane, :]      # (lane, lane)
    b1 = b_ref[0:1, :]                                    # (1, lane)
    b2 = b_ref[1:2, :]
    bh = b_ref[2:3, :]

    # base_network: Linear -> ReLU -> Linear -> ReLU (padding lanes stay 0).
    h = jnp.maximum(jnp.dot(x, w1, preferred_element_type=jnp.float32) + b1, 0.0)
    h = jnp.maximum(jnp.dot(h, w2, preferred_element_type=jnp.float32) + b2, 0.0)

    # Fused head matmul: columns [0:A)=mean, [A:2A)=std, [2A:2A+1)=critic.
    z = jnp.dot(h, wh, preferred_element_type=jnp.float32) + bh

    col = jax.lax.broadcasted_iota(jnp.int32, z.shape, 1)
    out = jnp.where(col < n_actions, jnp.tanh(z),
                    jnp.where(col < 2 * n_actions, jax.nn.sigmoid(z), z))
    out_ref[...] = out                                    # single lane-dense store


# ----------------------------------------------------------------------------
# Parameter packing (done once, outside the kernel).
# ----------------------------------------------------------------------------
def pack_params(params, obs_dim, hidden_layers, n_actions):
    """Packs the 11 per-layer arrays into one weight blob and one bias blob.

    Returns (W_blob, B_blob, meta) with
      W_blob: (obs_pad + 2*lane, lane) f32
      B_blob: (3, lane) f32
    """
    h1, h2 = hidden_layers
    n_head = 2 * n_actions + 1
    lane = _round_up(max(h1, h2, n_head, 128), 128)   # lane-dense width
    obs_pad = _round_up(obs_dim, 8)                   # sublane-aligned w2 offset

    def pad_to(a, rows, cols):
        out = jnp.zeros((rows, cols), jnp.float32)
        return out.at[:a.shape[0], :a.shape[1]].set(a.astype(jnp.float32))

    w1 = pad_to(params["w1"], obs_pad, lane)                              # (obs_pad, lane)
    w2 = pad_to(params["w2"], lane, lane)                                 # (lane, lane)
    wh = pad_to(jnp.concatenate([params["wm"], params["ws"], params["wc"]],
                                axis=1), lane, lane)                      # (lane, lane)
    W_blob = jnp.concatenate([w1, w2, wh], axis=0)

    b1 = pad_to(params["b1"], 1, lane)
    b2 = pad_to(params["b2"], 1, lane)
    bh = pad_to(jnp.concatenate([params["bm"], params["bs"], params["bc"]],
                                axis=1), 1, lane)
    B_blob = jnp.concatenate([b1, b2, bh], axis=0)                        # (3, lane)

    meta = dict(obs_dim=obs_dim, obs_pad=obs_pad, lane=lane, n_actions=n_actions)
    return W_blob, B_blob, meta


# ----------------------------------------------------------------------------
# Wrapper
# ----------------------------------------------------------------------------
def actor_forward(x, W_blob, B_blob, meta):
    """Runs the fused ActorNetwork forward pass in one Pallas kernel.

    Returns (mean_action, std_action, critic_output).
    """
    B = x.shape[0]
    lane = meta["lane"]
    A = meta["n_actions"]

    kernel = functools.partial(
        actor_kernel,
        obs_dim=meta["obs_dim"], obs_pad=meta["obs_pad"],
        lane=lane, n_actions=A)

    vmem_spec = pl.BlockSpec(memory_space=pltpu.MemorySpace.VMEM)

    # No grid: everything fits in VMEM at these shapes. For large RL rollout
    # batches, add a 1-D "parallel" grid over the batch (weights unblocked).
    out = pl.pallas_call(
        kernel,
        out_shape=jax.ShapeDtypeStruct((B, lane), jnp.float32),
        in_specs=[vmem_spec, vmem_spec, vmem_spec],
        out_specs=vmem_spec,
    )(x, W_blob, B_blob)

    mean = out[:, :A]
    std = out[:, A:2 * A]
    critic = out[:, 2 * A:2 * A + 1]
    return mean, std, critic


# ----------------------------------------------------------------------------
# Deterministic parameter initialization (mirrors the module's __init__).
# ----------------------------------------------------------------------------
def _orthogonal(key, in_dim, out_dim):
    """Orthogonal init (PyTorch nn.init.orthogonal_), stored as (in, out)."""
    n, m = max(out_dim, in_dim), min(out_dim, in_dim)
    a = jax.random.normal(key, (n, m), dtype=jnp.float32)
    q, r = jnp.linalg.qr(a)
    q = q * jnp.sign(jnp.diagonal(r))
    w_out_in = q if out_dim >= in_dim else q.T          # (out, in)
    return jnp.asarray(w_out_in.T, dtype=jnp.float32)   # stored as (in, out)


def _default_linear(key, in_dim, out_dim):
    """PyTorch default Linear init: U(-1/sqrt(in), 1/sqrt(in))."""
    kw, kb = jax.random.split(key)
    bound = 1.0 / jnp.sqrt(jnp.asarray(in_dim, jnp.float32))
    w = jax.random.uniform(kw, (in_dim, out_dim), jnp.float32, -bound, bound)
    b = jax.random.uniform(kb, (1, out_dim), jnp.float32, -bound, bound)
    return w, b


def init_params(key, obs_dim, hidden_layers, n_actions):
    k1, k2, km, ks, kc = jax.random.split(key, 5)
    h1, h2 = hidden_layers
    params = {
        "w1": _orthogonal(k1, obs_dim, h1),
        "b1": jnp.zeros((1, h1), jnp.float32),
        "w2": _orthogonal(k2, h1, h2),
        "b2": jnp.zeros((1, h2), jnp.float32),
    }
    params["wm"], params["bm"] = _default_linear(km, h2, n_actions)
    params["ws"], params["bs"] = _default_linear(ks, h2, n_actions)
    params["wc"], params["bc"] = _default_linear(kc, h2, 1)
    return params


# ----------------------------------------------------------------------------
# Pure-JAX reference for sanity checking.
# ----------------------------------------------------------------------------
def actor_forward_ref(x, p):
    h = jnp.maximum(x @ p["w1"] + p["b1"], 0.0)
    h = jnp.maximum(h @ p["w2"] + p["b2"], 0.0)
    mean = jnp.tanh(h @ p["wm"] + p["bm"])
    std = jax.nn.sigmoid(h @ p["ws"] + p["bs"])
    critic = h @ p["wc"] + p["bc"]
    return mean, std, critic


# TODO(synk): save_checkpoint / load_checkpoint (torch.save/load) have no
# Pallas equivalent and are intentionally not implemented.

if __name__ == "__main__":
    key = jax.random.PRNGKey(0)
    k_param, k_x = jax.random.split(key)

    batch = 8
    obs_dim = 8              # observation_space.shape[0]
    hidden_layers = (32, 32)
    n_actions = 4

    params = init_params(k_param, obs_dim, hidden_layers, n_actions)
    W_blob, B_blob, meta = pack_params(params, obs_dim, hidden_layers, n_actions)
    x = jax.random.normal(k_x, (batch, obs_dim), dtype=jnp.float32)

    mean, std, critic = actor_forward(x, W_blob, B_blob, meta)
    jax.block_until_ready((mean, std, critic))

    mean_r, std_r, critic_r = actor_forward_ref(x, params)
    assert mean.shape == (batch, n_actions)
    assert std.shape == (batch, n_actions)
    assert critic.shape == (batch, 1)
    assert jnp.allclose(mean, mean_r, atol=1e-5)
    assert jnp.allclose(std, std_r, atol=1e-5)
    assert jnp.allclose(critic, critic_r, atol=1e-5)

    print("KERNEL_OK")
</pallas_src>

<mosaic_0001>
module attributes {stable_mosaic.version = 11 : i64} {
  func.func @actor_kernel(%arg0: memref<8x8xf32, #tpu.memory_space<vmem>>, %arg1: memref<264x128xf32, #tpu.memory_space<vmem>>, %arg2: memref<3x128xf32, #tpu.memory_space<vmem>>, %arg3: memref<8x128xf32, #tpu.memory_space<vmem>>) attributes {dimension_semantics = [], scalar_prefetch = 0 : i64, scratch_operands = 0 : i64, tpu.core_type = #tpu.core_type<tc>} {
    %c0 = arith.constant 0 : index
    %c0_0 = arith.constant 0 : index
    %0 = vector.load %arg0[%c0, %c0_0] : memref<8x8xf32, #tpu.memory_space<vmem>>, vector<8x8xf32>
    %c0_1 = arith.constant 0 : index
    %c0_2 = arith.constant 0 : index
    %1 = vector.load %arg1[%c0_1, %c0_2] : memref<264x128xf32, #tpu.memory_space<vmem>>, vector<8x128xf32>
    %c8 = arith.constant 8 : index
    %c0_3 = arith.constant 0 : index
    %2 = vector.load %arg1[%c8, %c0_3] : memref<264x128xf32, #tpu.memory_space<vmem>>, vector<128x128xf32>
    %c136 = arith.constant 136 : index
    %c0_4 = arith.constant 0 : index
    %3 = vector.load %arg1[%c136, %c0_4] : memref<264x128xf32, #tpu.memory_space<vmem>>, vector<128x128xf32>
    %c0_5 = arith.constant 0 : index
    %c0_6 = arith.constant 0 : index
    %4 = vector.load %arg2[%c0_5, %c0_6] : memref<3x128xf32, #tpu.memory_space<vmem>>, vector<1x128xf32>
    %c1 = arith.constant 1 : index
    %c0_7 = arith.constant 0 : index
    %5 = vector.load %arg2[%c1, %c0_7] : memref<3x128xf32, #tpu.memory_space<vmem>>, vector<1x128xf32>
    %c2 = arith.constant 2 : index
    %c0_8 = arith.constant 0 : index
    %6 = vector.load %arg2[%c2, %c0_8] : memref<3x128xf32, #tpu.memory_space<vmem>>, vector<1x128xf32>
    %cst = arith.constant dense<0.000000e+00> : vector<8x128xf32>
    %7 = tpu.matmul %0, %1, %cst {dimension_numbers = #tpu.dot_dimension_numbers<[1], [0], [0], [1], [0, 0, 1, 1], [], []>} : vector<8x8xf32>, vector<8x128xf32>, vector<8x128xf32> -> vector<8x128xf32>
    %8 = vector.broadcast %4 : vector<1x128xf32> to vector<8x128xf32>
    %9 = arith.addf %7, %8 : vector<8x128xf32>
    %cst_9 = arith.constant 0.000000e+00 : f32
    %10 = vector.broadcast %cst_9 : f32 to vector<8x128xf32>
    %11 = arith.maximumf %9, %10 : vector<8x128xf32>
    %cst_10 = arith.constant dense<0.000000e+00> : vector<8x128xf32>
    %12 = tpu.matmul %11, %2, %cst_10 {dimension_numbers = #tpu.dot_dimension_numbers<[1], [0], [0], [1], [0, 0, 1, 1], [], []>} : vector<8x128xf32>, vector<128x128xf32>, vector<8x128xf32> -> vector<8x128xf32>
    %13 = vector.broadcast %5 : vector<1x128xf32> to vector<8x128xf32>
    %14 = arith.addf %12, %13 : vector<8x128xf32>
    %cst_11 = arith.constant 0.000000e+00 : f32
    %15 = vector.broadcast %cst_11 : f32 to vector<8x128xf32>
    %16 = arith.maximumf %14, %15 : vector<8x128xf32>
    %cst_12 = arith.constant dense<0.000000e+00> : vector<8x128xf32>
    %17 = tpu.matmul %16, %3, %cst_12 {dimension_numbers = #tpu.dot_dimension_numbers<[1], [0], [0], [1], [0, 0, 1, 1], [], []>} : vector<8x128xf32>, vector<128x128xf32>, vector<8x128xf32> -> vector<8x128xf32>
    %18 = vector.broadcast %6 : vector<1x128xf32> to vector<8x128xf32>
    %19 = arith.addf %17, %18 : vector<8x128xf32>
    %20 = tpu.iota {dimensions = array<i32: 1>} : vector<8x128xi32>
    %c4_i32 = arith.constant 4 : i32
    %21 = vector.broadcast %c4_i32 : i32 to vector<8x128xi32>
    %22 = arith.cmpi slt, %20, %21 : vector<8x128xi32>
    %23 = math.tanh %19 : vector<8x128xf32>
    %c8_i32 = arith.constant 8 : i32
    %24 = vector.broadcast %c8_i32 : i32 to vector<8x128xi32>
    %25 = arith.cmpi slt, %20, %24 : vector<8x128xi32>
    %26 = arith.negf %19 : vector<8x128xf32>
    %27 = math.exp %26 : vector<8x128xf32>
    %cst_13 = arith.constant 1.000000e+00 : f32
    %28 = vector.broadcast %cst_13 : f32 to vector<8x128xf32>
    %29 = arith.addf %28, %27 : vector<8x128xf32>
    %30 = arith.divf %28, %29 : vector<8x128xf32>
    %31 = arith.select %25, %30, %19 : vector<8x128xi1>, vector<8x128xf32>
    %32 = arith.select %22, %23, %31 : vector<8x128xi1>, vector<8x128xf32>
    %c0_14 = arith.constant 0 : index
    %c0_15 = arith.constant 0 : index
    %33 = vector.load %arg3[%c0_14, %c0_15] : memref<8x128xf32, #tpu.memory_space<vmem>>, vector<8x128xf32>
    tpu.vector_store %arg3[%c0_14, %c0_15], %32 {strides = array<i32>} : memref<8x128xf32, #tpu.memory_space<vmem>>, vector<8x128xf32>,
    return
  }
}

</mosaic_0001>

<llo_original>
// kernel: tpu_custom_call.1
$region0: #{tpu_custom_call.1}
  #allocation0 [shape = 'u32[]', space=smem, size = 0x4, offset = 0x4, fixed_abs, tag = 'smem constant byte address 0x4 - core index']
  #allocation1 [shape = 'u32[144,128]{1,0:T(1,128)}', space=vmem, size = 0x12000, scoped, tag = 'internal scratch']
  %s0 = inlined_call_operand.hbm [shape: f32[8,8], index: 0, kind: input, shape index: {}]
  %s1 = inlined_call_operand.hbm [shape: f32[264,128], index: 1, kind: input, shape index: {}]
  %s2 = inlined_call_operand.vmem [shape: f32[3,128], index: 2, kind: input, shape index: {}]
  %s3 = inlined_call_operand.hbm [shape: f32[8,128], index: 3, kind: output, shape index: {}]
  %s4 = sld [smem:[#allocation0]]
  $region30: #{tpu_custom_call.1} parent=0
    _
  %s6 = ssub.s32 1, %s4
  %s7 = scalar_select 0, %s6, %s4
  $region1: #{tpu_custom_call.1} parent=0
    #allocation2 [shape = 'u8[4096]{0}', space=vmem, size = 0x1000, scoped, tag = 'input window, operand 0, single buffered']
    #allocation3 [shape = 's32[1]{0}', space=sflag, size = 0x4, scoped, tag = 'scoped memory for tpu_custom_call.1']
    #allocation4 [shape = 's32[1]{0}', space=sflag, size = 0x4, scoped, tag = 'scoped memory for tpu_custom_call.1']
    #allocation5 [shape = 'u8[135168]{0}', space=vmem, size = 0x21000, scoped, tag = 'input window, operand 1, single buffered']
    #allocation6 [shape = 's32[1]{0}', space=sflag, size = 0x4, scoped, tag = 'scoped memory for tpu_custom_call.1']
    #allocation7 [shape = 'u8[4096]{0}', space=vmem, size = 0x1000, scoped, tag = 'output window, operand 0, single buffered']
    %8 = vsyncpa [#allocation3], 0
    %9 = vsyncpa [#allocation6], 0
    %10 = vsyncpa [#allocation4], 0
    // Predicated region
    $region2: #{tpu_custom_call.1} parent=1 // pred_check
      _
    $region3: #{tpu_custom_call.1} parent=1 // pred_check_branch
      %12 = sbr.rel (0) target = $region5
    $region4: #{tpu_custom_call.1} parent=1 // pred_region
      %s14 = ssub.s32 128, 128
      %15 = vsyncadd [#allocation3], %s14
      %s17 = sshll.u32 [#allocation2], 4
      %s18 = int_to_ptr.vmem [resolvable:$true] %s17
      %20 = dma.hbm_to_vmem [thread:$0]  %s0, 128, %s18, [#allocation3]
    $region5: #{tpu_custom_call.1} parent=1 // pred_fallthru
      _
    // Predicated region
    $region6: #{tpu_custom_call.1} parent=1 // pred_check
      _
    $region7: #{tpu_custom_call.1} parent=1 // pred_check_branch
      %22 = sbr.rel (0) target = $region9
    $region8: #{tpu_custom_call.1} parent=1 // pred_region
      %s24 = ssub.s32 4224, 4224
      %25 = vsyncadd [#allocation6], %s24
      %s26 = sshll.u32 [#allocation5], 4
      %s27 = int_to_ptr.vmem [resolvable:$true] %s26
      %32 = dma.hbm_to_vmem [thread:$0]  %s1, 4224, %s27, [#allocation6], 128, 128, 8
    $region9: #{tpu_custom_call.1} parent=1 // pred_fallthru
      _
    // Predicated region
    $region10: #{tpu_custom_call.1} parent=1 // pred_check
      _
    $region11: #{tpu_custom_call.1} parent=1 // pred_check_branch
      %34 = sbr.rel (0) target = $region13
    $region12: #{tpu_custom_call.1} parent=1 // pred_region
      _
    $region13: #{tpu_custom_call.1} parent=1 // pred_fallthru
      _
    // Predicated region
    $region14: #{tpu_custom_call.1} parent=1 // pred_check
      _
    $region15: #{tpu_custom_call.1} parent=1 // pred_check_branch
      %36 = sbr.rel (0) target = $region17
    $region16: #{tpu_custom_call.1} parent=1 // pred_region
      %37 = dma.done [#allocation3], 128
    $region17: #{tpu_custom_call.1} parent=1 // pred_fallthru
      _
    // Predicated region
    $region18: #{tpu_custom_call.1} parent=1 // pred_check
      _
    $region19: #{tpu_custom_call.1} parent=1 // pred_check_branch
      %39 = sbr.rel (0) target = $region21
    $region20: #{tpu_custom_call.1} parent=1 // pred_region
      %40 = dma.done [#allocation6], 4224
    $region21: #{tpu_custom_call.1} parent=1 // pred_fallthru
      _
    %v41 = vld [vmem:[#allocation2] sm:$0xff]
    %v42 = vld [vmem:[#allocation5] sm:$0xff]
    %v43 = vld [vmem:[#allocation5 + $0x8] sm:$0xff]
    %v44 = vld [vmem:[#allocation5 + $0x10] sm:$0xff]
    %v45 = vld [vmem:[#allocation5 + $0x18] sm:$0xff]
    %v46 = vld [vmem:[#allocation5 + $0x20] sm:$0xff]
    %v47 = vld [vmem:[#allocation5 + $0x28] sm:$0xff]
    %v48 = vld [vmem:[#allocation5 + $0x30] sm:$0xff]
    %v49 = vld [vmem:[#allocation5 + $0x38] sm:$0xff]
    %v50 = vld [vmem:[#allocation5 + $0x40] sm:$0xff]
    %v51 = vld [vmem:[#allocation5 + $0x48] sm:$0xff]
    %v52 = vld [vmem:[#allocation5 + $0x50] sm:$0xff]
    %v53 = vld [vmem:[#allocation5 + $0x58] sm:$0xff]
    %v54 = vld [vmem:[#allocation5 + $0x60] sm:$0xff]
    %v55 = vld [vmem:[#allocation5 + $0x68] sm:$0xff]
    %v56 = vld [vmem:[#allocation5 + $0x70] sm:$0xff]
    %v57 = vld [vmem:[#allocation5 + $0x78] sm:$0xff]
    %v58 = vld [vmem:[#allocation5 + $0x80] sm:$0xff]
    %v59 = vld [vmem:[#allocation5 + $0x88] sm:$0xff]
    %v60 = vld [vmem:[#allocation5 + $0x90] sm:$0xff]
    %v61 = vld [vmem:[#allocation5 + $0x98] sm:$0xff]
    %v62 = vld [vmem:[#allocation5 + $0xa0] sm:$0xff]
    %v63 = vld [vmem:[#allocation5 + $0xa8] sm:$0xff]
    %v64 = vld [vmem:[#allocation5 + $0xb0] sm:$0xff]
    %v65 = vld [vmem:[#allocation5 + $0xb8] sm:$0xff]
    %v66 = vld [vmem:[#allocation5 + $0xc0] sm:$0xff]
    %v67 = vld [vmem:[#allocation5 + $0xc8] sm:$0xff]
    %v68 = vld [vmem:[#allocation5 + $0xd0] sm:$0xff]
    %v69 = vld [vmem:[#allocation5 + $0xd8] sm:$0xff]
    %v70 = vld [vmem:[#allocation5 + $0xe0] sm:$0xff]
    %v71 = vld [vmem:[#allocation5 + $0xe8] sm:$0xff]
    %v72 = vld [vmem:[#allocation5 + $0xf0] sm:$0xff]
    %v73 = vld [vmem:[#allocation5 + $0xf8] sm:$0xff]
    %v74 = vld [vmem:[#allocation5 + $0x100] sm:$0xff]
    %v75 = vld [vmem:[%s2] sm:$0x1]
    %v76 = vld [vmem:[%s2 + $0x1] sm:$0x1]
    %v77 = vld [vmem:[%s2 + $0x2] sm:$0x1]
    %v78 = vlaneseq
    %v79 = vshrl.u32 %v78, 7
    %v80 = vsub.s32 0, %v79
    %v81 = vrot.slane %v75, %v80
    %vm82 = vcmask 64512
    %v84 = vsel %vm82, %v41, 0
    %86 = vmatprep.subr.mxu0 0.0
    %87 = vmatpush1.msra.mxu0 %v42
    %88 = vmatprep.subr.mxu0 0.0
    %89 = vmatpush1.msra.mxu0 0.0
    %90 = vmatprep.subr.mxu0 0.0
    %91 = vmatpush1.msra.mxu0 0.0
    %92 = vmatprep.subr.mxu0 0.0
    %93 = vmatpush1.msra.mxu0 0.0
    %94 = vmatprep.subr.mxu0 0.0
    %95 = vmatpush1.msra.mxu0 0.0
    %96 = vmatprep.subr.mxu0 0.0
    %97 = vmatpush1.msra.mxu0 0.0
    %98 = vmatprep.subr.mxu0 0.0
    %99 = vmatpush1.msra.mxu0 0.0
    %100 = vmatprep.subr.mxu0 0.0
    %101 = vmatpush1.msra.mxu0 0.0
    %102 = vmatprep.subr.mxu0 0.0
    %103 = vmatpush1.msra.mxu0 0.0
    %104 = vmatprep.subr.mxu0 0.0
    %105 = vmatpush1.msra.mxu0 0.0
    %106 = vmatprep.subr.mxu0 0.0
    %107 = vmatpush1.msra.mxu0 0.0
    %108 = vmatprep.subr.mxu0 0.0
    %109 = vmatpush1.msra.mxu0 0.0
    %110 = vmatprep.subr.mxu0 0.0
    %111 = vmatpush1.msra.mxu0 0.0
    %112 = vmatprep.subr.mxu0 0.0
    %113 = vmatpush1.msra.mxu0 0.0
    %114 = vmatprep.subr.mxu0 0.0
    %115 = vmatpush1.msra.mxu0 0.0
    %116 = vmatprep.subr.mxu0 0.0
    %117 = vmatpush1.msra.mxu0 0.0
    %118 = vmatprep.subr.mxu0 0.0
    %119 = vmatpush1.msra.mxu0 0.0
    %120 = vmatprep.subr.mxu0 0.0
    %121 = vmatpush1.msra.mxu0 0.0
    %122 = vmatprep.subr.mxu0 0.0
    %123 = vmatpush1.msra.mxu0 0.0
    %124 = vmatprep.subr.mxu0 0.0
    %125 = vmatpush1.msra.mxu0 0.0
    %126 = vmatprep.subr.mxu0 0.0
    %127 = vmatpush1.msra.mxu0 0.0
    %128 = vmatprep.subr.mxu0 0.0
    %129 = vmatpush1.msra.mxu0 0.0
    %130 = vmatprep.subr.mxu0 0.0
    %131 = vmatpush1.msra.mxu0 0.0
    %132 = vmatprep.subr.mxu0 0.0
    %133 = vmatpush1.msra.mxu0 0.0
    %134 = vmatprep.subr.mxu0 0.0
    %135 = vmatpush1.msra.mxu0 0.0
    %136 = vmatprep.subr.mxu0 0.0
    %137 = vmatpush1.msra.mxu0 0.0
    %138 = vmatprep.subr.mxu0 0.0
    %139 = vmatpush1.msra.mxu0 0.0
    %140 = vmatprep.subr.mxu0 0.0
    %141 = vmatpush1.msra.mxu0 0.0
    %142 = vmatprep.subr.mxu0 0.0
    %143 = vmatpush1.msra.mxu0 0.0
    %144 = vmatprep.subr.mxu0 0.0
    %145 = vmatpush1.msra.mxu0 0.0
    %146 = vmatprep.subr.mxu0 0.0
    %147 = vmatpush1.msra.mxu0 0.0
    %148 = vmatprep.subr.mxu0 0.0
    %149 = vmatpush1.msra.mxu0 0.0
    %150 = vmatprep.mubr.f32.mxu0 0.0
    %151 = vmatmul.mubr.f32.gmra.mrb[0].mxu0 %v84
    %v152 = vpop.f32.mrb[0].mxu0
    %v153 = vadd.f32 %v81, %v152
    %v154 = vpop.f32.mrb[0].mxu0
    %155 = vdwg.mxu0
    %v156 = vmax.f32 %v153, 0.0
    %v157 = vlaneseq
    %v158 = vshrl.u32 %v157, 7
    %v159 = vsub.s32 0, %v158
    %v160 = vrot.slane %v76, %v159
    %161 = vmatprep.subr.mxu0 0.0
    %162 = vmatpush1.msra.mxu0 %v43
    %163 = vmatprep.subr.mxu0 0.0
    %164 = vmatpush1.msra.mxu0 %v44
    %165 = vmatprep.subr.mxu0 0.0
    %166 = vmatpush1.msra.mxu0 %v45
    %167 = vmatprep.subr.mxu0 0.0
    %168 = vmatpush1.msra.mxu0 %v46
    %169 = vmatprep.subr.mxu0 0.0
    %170 = vmatpush1.msra.mxu0 %v47
    %171 = vmatprep.subr.mxu0 0.0
    %172 = vmatpush1.msra.mxu0 %v48
    %173 = vmatprep.subr.mxu0 0.0
    %174 = vmatpush1.msra.mxu0 %v49
    %175 = vmatprep.subr.mxu0 0.0
    %176 = vmatpush1.msra.mxu0 %v50
    %177 = vmatprep.subr.mxu0 0.0
    %178 = vmatpush1.msra.mxu0 %v51
    %179 = vmatprep.subr.mxu0 0.0
    %180 = vmatpush1.msra.mxu0 %v52
    %181 = vmatprep.subr.mxu0 0.0
    %182 = vmatpush1.msra.mxu0 %v53
    %183 = vmatprep.subr.mxu0 0.0
    %184 = vmatpush1.msra.mxu0 %v54
    %185 = vmatprep.subr.mxu0 0.0
    %186 = vmatpush1.msra.mxu0 %v55
    %187 = vmatprep.subr.mxu0 0.0
    %188 = vmatpush1.msra.mxu0 %v56
    %189 = vmatprep.subr.mxu0 0.0
    %190 = vmatpush1.msra.mxu0 %v57
    %191 = vmatprep.subr.mxu0 0.0
    %192 = vmatpush1.msra.mxu0 %v58
    %193 = vmatprep.subr.mxu0 0.0
    %194 = vmatpush1.msra.mxu0 0.0
    %195 = vmatprep.subr.mxu0 0.0
    %196 = vmatpush1.msra.mxu0 0.0
    %197 = vmatprep.subr.mxu0 0.0
    %198 = vmatpush1.msra.mxu0 0.0
    %199 = vmatprep.subr.mxu0 0.0
    %200 = vmatpush1.msra.mxu0 0.0
    %201 = vmatprep.subr.mxu0 0.0
    %202 = vmatpush1.msra.mxu0 0.0
    %203 = vmatprep.subr.mxu0 0.0
    %204 = vmatpush1.msra.mxu0 0.0
    %205 = vmatprep.subr.mxu0 0.0
    %206 = vmatpush1.msra.mxu0 0.0
    %207 = vmatprep.subr.mxu0 0.0
    %208 = vmatpush1.msra.mxu0 0.0
    %209 = vmatprep.subr.mxu0 0.0
    %210 = vmatpush1.msra.mxu0 0.0
    %211 = vmatprep.subr.mxu0 0.0
    %212 = vmatpush1.msra.mxu0 0.0
    %213 = vmatprep.subr.mxu0 0.0
    %214 = vmatpush1.msra.mxu0 0.0
    %215 = vmatprep.subr.mxu0 0.0
    %216 = vmatpush1.msra.mxu0 0.0
    %217 = vmatprep.subr.mxu0 0.0
    %218 = vmatpush1.msra.mxu0 0.0
    %219 = vmatprep.subr.mxu0 0.0
    %220 = vmatpush1.msra.mxu0 0.0
    %221 = vmatprep.subr.mxu0 0.0
    %222 = vmatpush1.msra.mxu0 0.0
    %223 = vmatprep.subr.mxu0 0.0
    %224 = vmatpush1.msra.mxu0 0.0
    %225 = vmatprep.mubr.f32.mxu0 0.0
    %226 = vmatmul.mubr.f32.gmra.mrb[0].mxu0 %v156
    %v227 = vpop.f32.mrb[0].mxu0
    %v228 = vadd.f32 %v160, %v227
    %v229 = vpop.f32.mrb[0].mxu0
    %230 = vdwg.mxu0
    %v231 = vmax.f32 %v228, 0.0
    %v232 = vlaneseq
    %v233 = vshrl.u32 %v232, 7
    %v234 = vsub.s32 0, %v233
    %v235 = vrot.slane %v77, %v234
    %236 = vmatprep.subr.mxu0 0.0
    %237 = vmatpush1.msra.mxu0 %v59
    %238 = vmatprep.subr.mxu0 0.0
    %239 = vmatpush1.msra.mxu0 %v60
    %240 = vmatprep.subr.mxu0 0.0
    %241 = vmatpush1.msra.mxu0 %v61
    %242 = vmatprep.subr.mxu0 0.0
    %243 = vmatpush1.msra.mxu0 %v62
    %244 = vmatprep.subr.mxu0 0.0
    %245 = vmatpush1.msra.mxu0 %v63
    %246 = vmatprep.subr.mxu0 0.0
    %247 = vmatpush1.msra.mxu0 %v64
    %248 = vmatprep.subr.mxu0 0.0
    %249 = vmatpush1.msra.mxu0 %v65
    %250 = vmatprep.subr.mxu0 0.0
    %251 = vmatpush1.msra.mxu0 %v66
    %252 = vmatprep.subr.mxu0 0.0
    %253 = vmatpush1.msra.mxu0 %v67
    %254 = vmatprep.subr.mxu0 0.0
    %255 = vmatpush1.msra.mxu0 %v68
    %256 = vmatprep.subr.mxu0 0.0
    %257 = vmatpush1.msra.mxu0 %v69
    %258 = vmatprep.subr.mxu0 0.0
    %259 = vmatpush1.msra.mxu0 %v70
    %260 = vmatprep.subr.mxu0 0.0
    %261 = vmatpush1.msra.mxu0 %v71
    %262 = vmatprep.subr.mxu0 0.0
    %263 = vmatpush1.msra.mxu0 %v72
    %264 = vmatprep.subr.mxu0 0.0
    %265 = vmatpush1.msra.mxu0 %v73
    %266 = vmatprep.subr.mxu0 0.0
    %267 = vmatpush1.msra.mxu0 %v74
    %268 = vmatprep.subr.mxu0 0.0
    %269 = vmatpush1.msra.mxu0 0.0
    %270 = vmatprep.subr.mxu0 0.0
    %271 = vmatpush1.msra.mxu0 0.0
    %272 = vmatprep.subr.mxu0 0.0
    %273 = vmatpush1.msra.mxu0 0.0
    %274 = vmatprep.subr.mxu0 0.0
    %275 = vmatpush1.msra.mxu0 0.0
    %276 = vmatprep.subr.mxu0 0.0
    %277 = vmatpush1.msra.mxu0 0.0
    %278 = vmatprep.subr.mxu0 0.0
    %279 = vmatpush1.msra.mxu0 0.0
    %280 = vmatprep.subr.mxu0 0.0
    %281 = vmatpush1.msra.mxu0 0.0
    %282 = vmatprep.subr.mxu0 0.0
    %283 = vmatpush1.msra.mxu0 0.0
    %284 = vmatprep.subr.mxu0 0.0
    %285 = vmatpush1.msra.mxu0 0.0
    %286 = vmatprep.subr.mxu0 0.0
    %287 = vmatpush1.msra.mxu0 0.0
    %288 = vmatprep.subr.mxu0 0.0
    %289 = vmatpush1.msra.mxu0 0.0
    %290 = vmatprep.subr.mxu0 0.0
    %291 = vmatpush1.msra.mxu0 0.0
    %292 = vmatprep.subr.mxu0 0.0
    %293 = vmatpush1.msra.mxu0 0.0
    %294 = vmatprep.subr.mxu0 0.0
    %295 = vmatpush1.msra.mxu0 0.0
    %296 = vmatprep.subr.mxu0 0.0
    %297 = vmatpush1.msra.mxu0 0.0
    %298 = vmatprep.subr.mxu0 0.0
    %299 = vmatpush1.msra.mxu0 0.0
    %300 = vmatprep.mubr.f32.mxu0 0.0
    %301 = vmatmul.mubr.f32.gmra.mrb[0].mxu0 %v231
    %v302 = vpop.f32.mrb[0].mxu0
    %v303 = vadd.f32 %v235, %v302
    %v304 = vpop.f32.mrb[0].mxu0
    %305 = vdwg.mxu0
    %v306 = vlaneseq
    %v307 = vand.u32 %v306, 127
    %vm308 = vcmp.lt.s32.totalorder %v307, 4
    %v309 = vtanh.pop %v303
    %vm310 = vcmp.lt.s32.totalorder %v307, 8
    %v311 = vxor.u32 %v303, 2147483648
    %v312 = vmul.f32 %v311, 1.442695
    %v313 = vpow.pop %v312
    %v314 = vadd.f32 %v313, 1.0
    %v315 = vrcp.pop %v314
    %v316 = vmul.f32 1.0, %v315
    %v317 = vsel %vm310, %v316, %v303
    %v318 = vsel %vm308, %v309, %v317
    %319 = vst [vmem:[#allocation7] sm:$0xff] %v318
    // Predicated region
    $region22: #{tpu_custom_call.1} parent=1 // pred_check
      _
    $region23: #{tpu_custom_call.1} parent=1 // pred_check_branch
      %321 = sbr.rel (0) target = $region25
    $region24: #{tpu_custom_call.1} parent=1 // pred_region
      %s323 = ssub.s32 128, 128
      %324 = vsyncadd [#allocation4], %s323
      %s326 = sshll.u32 [#allocation7], 4
      %s327 = int_to_ptr.vmem [resolvable:$true] %s326
      %329 = dma.vmem_to_hbm [thread:$0]  %s327, 128, %s3, [#allocation4]
    $region25: #{tpu_custom_call.1} parent=1 // pred_fallthru
      _
    // Predicated region
    $region26: #{tpu_custom_call.1} parent=1 // pred_check
      _
    $region27: #{tpu_custom_call.1} parent=1 // pred_check_branch
      %331 = sbr.rel (0) target = $region29
    $region28: #{tpu_custom_call.1} parent=1 // pred_region
      %332 = dma.done [#allocation4], 128
    $region29: #{tpu_custom_call.1} parent=1 // pred_fallthru
      _
    %333 = vsyncpa [#allocation3], 1
    %334 = vsyncpa [#allocation6], 1
    %335 = vsyncpa [#allocation4], 1

</llo_original>
